<compile_context>
chip_gen: v7x
topology: tpu7x:2x2x1
jax: 0.10.0
libtpu: 0.0.40
codegen_flags: <defaults>
</compile_context>

<pallas_src>
import functools
import math

import numpy as np
import jax
import jax.numpy as jnp
from jax import lax
from jax.experimental import pallas as pl
from jax.experimental.pallas import tpu as pltpu


# ---------------------------------------------------------------------------
# spectral normalization (weight preprocessing, same math as torch SpectralNorm)
# ---------------------------------------------------------------------------
def spectral_normalize(w, u0, n_power_iterations=1, eps=1e-12):
    def _norm(v):
        return v / jnp.maximum(jnp.linalg.norm(v), eps)

    wm = w.reshape(w.shape[0], -1)                       # (Cout, Cin*9)
    u = _norm(u0)
    v = _norm(wm.T @ u)
    for _ in range(max(n_power_iterations - 1, 0)):
        u = _norm(wm @ v)
        v = _norm(wm.T @ u)
    u = _norm(wm @ v)
    sigma = jnp.dot(u, wm @ v)
    return w / sigma


# ---------------------------------------------------------------------------
# wrapper-side constant builder: fused tap weight matrix (3*Cin*Wp, Npad)
#   Wf[a*Cin*Wp + c*Wp + 2*j + b, co*Wo + j] = w_sn[co, c, a, b]
# ---------------------------------------------------------------------------
def _fused_weight(w_sn, wp: int, wo: int, n_pad: int):
    cout, cin, _, _ = w_sn.shape
    k = 3 * cin * wp
    a_i, c_i, b_i, j_i, co_i = np.meshgrid(
        np.arange(3), np.arange(cin), np.arange(3), np.arange(wo), np.arange(cout),
        indexing="ij")
    rows = (a_i * (cin * wp) + c_i * wp + 2 * j_i + b_i).ravel()
    cols = (co_i * wo + j_i).ravel()
    vals = w_sn[co_i, c_i, a_i, b_i].ravel()
    return jnp.zeros((k, n_pad), jnp.float32).at[rows, cols].set(vals)


# ---------------------------------------------------------------------------
# Pallas kernel: one batch tile per grid step, single fused MXU matmul
# ---------------------------------------------------------------------------
def _conv_lrelu_kernel(xe_ref, xo_ref, w_ref, b_ref, out_ref, *, ho, neg_slope):
    bt = xe_ref.shape[0]
    rows = []
    for b in range(bt):                                   # static, small
        xe = xe_ref[b]                                    # (Ho+1, Cin*Wp)  padded rows 0,2,...,2*Ho
        xo = xo_ref[b]                                    # (Ho,   Cin*Wp)  padded rows 1,3,...,2*Ho-1
        # taps for output row i: even[i] (a=0), odd[i] (a=1), even[i+1] (a=2)
        rows.append(jnp.concatenate([xe[:ho], xo, xe[1:]], axis=-1))   # (Ho, 3*Cin*Wp)
    lhs = rows[0] if bt == 1 else jnp.concatenate(rows, axis=0)        # (Bt*Ho, 3*Cin*Wp) bf16
    # single MXU matmul, f32 accumulation
    acc = jnp.dot(lhs, w_ref[...], preferred_element_type=jnp.float32)  # (Bt*Ho, Npad) f32
    acc = acc + b_ref[...]                                              # bias row (f32)
    out_ref[...] = jnp.maximum(acc, neg_slope * acc).astype(out_ref.dtype)


# ---------------------------------------------------------------------------
# wrapper
# ---------------------------------------------------------------------------
def conv_block(x, w_sn, bias, *, neg_slope=0.2, batch_tile=None):
    B, cin, H, W = x.shape
    cout = w_sn.shape[0]
    ho = (H - 1) // 2 + 1
    wo = (W - 1) // 2 + 1
    hp, wp = H + 2, W + 2
    n_pad = ((cout * wo + 127) // 128) * 128              # lane-dense output width

    if batch_tile is None:
        # one step for small B (best on the single-TC v5e/v6e); on v7x with larger B pick
        # batch_tile <= B/2 so both TensorCores get a grid step.
        batch_tile = B
    bt = batch_tile
    n_tiles = (B + bt - 1) // bt
    b_pad = n_tiles * bt

    # layout plumbing (wrapper-side): zero-pad, pack channels along the lane axis,
    # split padded rows into even/odd planes, cast MXU inputs to bf16.
    xpad = jnp.pad(x.astype(jnp.float32), ((0, b_pad - B), (0, 0), (1, 1), (1, 1)))
    xl = xpad.transpose(0, 2, 1, 3).reshape(b_pad, hp, cin * wp).astype(jnp.bfloat16)
    x_even = xl[:, 0:2 * ho + 1:2, :]                     # (b_pad, ho+1, cin*wp)
    x_odd = xl[:, 1:2 * ho:2, :]                          # (b_pad, ho,   cin*wp)

    wf = _fused_weight(w_sn.astype(jnp.float32), wp, wo, n_pad).astype(jnp.bfloat16)
    brow = jnp.zeros((1, n_pad), jnp.float32).at[0, :cout * wo].set(
        jnp.repeat(bias.astype(jnp.float32), wo))         # bias stays f32 (epilogue in f32)

    kernel = functools.partial(_conv_lrelu_kernel, ho=ho, neg_slope=neg_slope)

    out_flat = pl.pallas_call(
        kernel,
        out_shape=jax.ShapeDtypeStruct((n_tiles * bt * ho, n_pad), x.dtype),
        grid=(n_tiles,),
        in_specs=[
            pl.BlockSpec((bt, ho + 1, cin * wp), lambda t: (t, 0, 0)),   # even padded rows (bf16)
            pl.BlockSpec((bt, ho, cin * wp), lambda t: (t, 0, 0)),       # odd padded rows  (bf16)
            pl.BlockSpec((3 * cin * wp, n_pad), lambda t: (0, 0)),       # fused tap weights (bf16)
            pl.BlockSpec((1, n_pad), lambda t: (0, 0)),                  # bias row (f32)
        ],
        out_specs=pl.BlockSpec((bt * ho, n_pad), lambda t: (t, 0)),      # lane-dense output
        compiler_params=pltpu.CompilerParams(dimension_semantics=("parallel",)),
    )(x_even, x_odd, wf, brow)

    # un-pack lanes / strip padding back to NCHW
    out = out_flat.reshape(b_pad, ho, n_pad)[:B, :, :cout * wo]
    return out.reshape(B, ho, cout, wo).transpose(0, 2, 1, 3)


# ---------------------------------------------------------------------------
# pure-JAX reference (same math)
# ---------------------------------------------------------------------------
def reference(x, w_sn, bias, *, neg_slope=0.2):
    out = lax.conv_general_dilated(
        x, w_sn, window_strides=(2, 2), padding=((1, 1), (1, 1)),
        dimension_numbers=("NCHW", "OIHW", "NCHW"))
    out = out + bias[None, :, None, None]
    return jnp.where(out > 0, out, neg_slope * out)


if __name__ == "__main__":
    ni, no = 4, 8
    B, H, W = 2, 16, 16

    key = jax.random.PRNGKey(0)
    k1, k2, k3, k4 = jax.random.split(key, 4)

    # conv: xavier_uniform(gain=1.0); bias: PyTorch default uniform(+-1/sqrt(fan_in))
    xav = math.sqrt(6.0 / (ni * 9 + no * 9))
    wconv = jax.random.uniform(k1, (no, ni, 3, 3), jnp.float32, -xav, xav)
    bb = 1.0 / math.sqrt(ni * 9)
    bconv = jax.random.uniform(k2, (no,), jnp.float32, -bb, bb)
    u0 = jax.random.normal(k3, (no,), jnp.float32)       # SpectralNorm's persistent u buffer

    x = jax.random.normal(k4, (B, ni, H, W), jnp.float32)

    # spectral-normalized weight (forward-pass weight used by the module)
    w_sn = spectral_normalize(wconv, u0, n_power_iterations=1)

    out = conv_block(x, w_sn, bconv)
    out = jax.block_until_ready(out)
    assert out.shape == (B, no, H // 2, W // 2)

    ref = jax.block_until_ready(reference(x, w_sn, bconv))
    np.testing.assert_allclose(np.asarray(out), np.asarray(ref), rtol=2e-2, atol=2e-2)

    print("KERNEL_OK")
</pallas_src>

<mosaic_0001>
module attributes {stable_mosaic.version = 11 : i64} {
  func.func @_conv_lrelu_kernel(%arg0: i32, %arg1: memref<2x9x72xbf16, #tpu.memory_space<vmem>>, %arg2: memref<2x8x72xbf16, #tpu.memory_space<vmem>>, %arg3: memref<216x128xbf16, #tpu.memory_space<vmem>>, %arg4: memref<1x128xf32, #tpu.memory_space<vmem>>, %arg5: memref<16x128xf32, #tpu.memory_space<vmem>>) attributes {dimension_semantics = [#tpu.dimension_semantics<parallel>], iteration_bounds = array<i64: 1>, scalar_prefetch = 0 : i64, scratch_operands = 0 : i64, tpu.core_type = #tpu.core_type<tc>, window_params = [{transform_indices = @transform_0, window_bounds = array<i64: 2, 9, 72>}, {transform_indices = @transform_1, window_bounds = array<i64: 2, 8, 72>}, {pipeline_mode = #tpu.pipeline_mode<synchronous>, transform_indices = @transform_2, window_bounds = array<i64: 216, 128>}, {pipeline_mode = #tpu.pipeline_mode<synchronous>, transform_indices = @transform_3, window_bounds = array<i64: 1, 128>}, {transform_indices = @transform_4, window_bounds = array<i64: 16, 128>}]} {
    %c0 = arith.constant 0 : index
    %c0_0 = arith.constant 0 : index
    %c0_1 = arith.constant 0 : index
    %0 = vector.load %arg1[%c0, %c0_0, %c0_1] : memref<2x9x72xbf16, #tpu.memory_space<vmem>>, vector<1x9x72xbf16>
    %1 = vector.shape_cast %0 : vector<1x9x72xbf16> to vector<9x72xbf16>
    %c0_2 = arith.constant 0 : index
    %c0_3 = arith.constant 0 : index
    %c0_4 = arith.constant 0 : index
    %2 = vector.load %arg2[%c0_2, %c0_3, %c0_4] : memref<2x8x72xbf16, #tpu.memory_space<vmem>>, vector<1x8x72xbf16>
    %3 = vector.shape_cast %2 : vector<1x8x72xbf16> to vector<8x72xbf16>
    %4 = vector.extract_strided_slice %1 {offsets = [0, 0], sizes = [8, 72], strides = [1, 1]} : vector<9x72xbf16> to vector<8x72xbf16>
    %5 = vector.extract_strided_slice %1 {offsets = [1, 0], sizes = [8, 72], strides = [1, 1]} : vector<9x72xbf16> to vector<8x72xbf16>
    %6 = tpu.concatenate %4, %3, %5 in 1 : vector<8x72xbf16>, vector<8x72xbf16>, vector<8x72xbf16> -> vector<8x216xbf16>
    %c1 = arith.constant 1 : index
    %c0_5 = arith.constant 0 : index
    %c0_6 = arith.constant 0 : index
    %7 = vector.load %arg1[%c1, %c0_5, %c0_6] : memref<2x9x72xbf16, #tpu.memory_space<vmem>>, vector<1x9x72xbf16>
    %8 = vector.shape_cast %7 : vector<1x9x72xbf16> to vector<9x72xbf16>
    %c1_7 = arith.constant 1 : index
    %c0_8 = arith.constant 0 : index
    %c0_9 = arith.constant 0 : index
    %9 = vector.load %arg2[%c1_7, %c0_8, %c0_9] : memref<2x8x72xbf16, #tpu.memory_space<vmem>>, vector<1x8x72xbf16>
    %10 = vector.shape_cast %9 : vector<1x8x72xbf16> to vector<8x72xbf16>
    %11 = vector.extract_strided_slice %8 {offsets = [0, 0], sizes = [8, 72], strides = [1, 1]} : vector<9x72xbf16> to vector<8x72xbf16>
    %12 = vector.extract_strided_slice %8 {offsets = [1, 0], sizes = [8, 72], strides = [1, 1]} : vector<9x72xbf16> to vector<8x72xbf16>
    %13 = tpu.concatenate %11, %10, %12 in 1 : vector<8x72xbf16>, vector<8x72xbf16>, vector<8x72xbf16> -> vector<8x216xbf16>
    %14 = tpu.concatenate %6, %13 in 0 : vector<8x216xbf16>, vector<8x216xbf16> -> vector<16x216xbf16>
    %c0_10 = arith.constant 0 : index
    %c0_11 = arith.constant 0 : index
    %15 = vector.load %arg3[%c0_10, %c0_11] : memref<216x128xbf16, #tpu.memory_space<vmem>>, vector<216x128xbf16>
    %cst = arith.constant dense<0.000000e+00> : vector<16x128xf32>
    %16 = tpu.matmul %14, %15, %cst {dimension_numbers = #tpu.dot_dimension_numbers<[1], [0], [0], [1], [0, 0, 1, 1], [], []>} : vector<16x216xbf16>, vector<216x128xbf16>, vector<16x128xf32> -> vector<16x128xf32>
    %c0_12 = arith.constant 0 : index
    %c0_13 = arith.constant 0 : index
    %17 = vector.load %arg4[%c0_12, %c0_13] : memref<1x128xf32, #tpu.memory_space<vmem>>, vector<1x128xf32>
    %18 = vector.broadcast %17 : vector<1x128xf32> to vector<16x128xf32>
    %19 = arith.addf %16, %18 : vector<16x128xf32>
    %cst_14 = arith.constant 2.000000e-01 : f32
    %20 = vector.broadcast %cst_14 : f32 to vector<16x128xf32>
    %21 = arith.mulf %20, %19 : vector<16x128xf32>
    %22 = arith.maximumf %19, %21 : vector<16x128xf32>
    %c0_15 = arith.constant 0 : index
    %c0_16 = arith.constant 0 : index
    %23 = vector.load %arg5[%c0_15, %c0_16] : memref<16x128xf32, #tpu.memory_space<vmem>>, vector<16x128xf32>
    tpu.vector_store %arg5[%c0_15, %c0_16], %22 {strides = array<i32>} : memref<16x128xf32, #tpu.memory_space<vmem>>, vector<16x128xf32>,
    return
  }
  func.func @transform_0(%arg0: i32) -> (i32, i32, i32) {
    %c0_i32 = arith.constant 0 : i32
    %c0_i32_0 = arith.constant 0 : i32
    %c0_i32_1 = arith.constant 0 : i32
    return %arg0, %c0_i32, %c0_i32_0 : i32, i32, i32
  }
  func.func @transform_1(%arg0: i32) -> (i32, i32, i32) {
    %c0_i32 = arith.constant 0 : i32
    %c0_i32_0 = arith.constant 0 : i32
    %c0_i32_1 = arith.constant 0 : i32
    return %arg0, %c0_i32, %c0_i32_0 : i32, i32, i32
  }
  func.func @transform_2(%arg0: i32) -> (i32, i32) {
    %c0_i32 = arith.constant 0 : i32
    %c0_i32_0 = arith.constant 0 : i32
    %c0_i32_1 = arith.constant 0 : i32
    return %c0_i32, %c0_i32_0 : i32, i32
  }
  func.func @transform_3(%arg0: i32) -> (i32, i32) {
    %c0_i32 = arith.constant 0 : i32
    %c0_i32_0 = arith.constant 0 : i32
    %c0_i32_1 = arith.constant 0 : i32
    return %c0_i32, %c0_i32_0 : i32, i32
  }
  func.func @transform_4(%arg0: i32) -> (i32, i32) {
    %c0_i32 = arith.constant 0 : i32
    %c0_i32_0 = arith.constant 0 : i32
    return %arg0, %c0_i32 : i32, i32
  }
}

</mosaic_0001>

<llo_original>
// kernel: tpu_custom_call.1
$region0: #{tpu_custom_call.1}
  #allocation0 [shape = 'u32[]', space=smem, size = 0x4, offset = 0x4, fixed_abs, tag = 'smem constant byte address 0x4 - core index']
  #allocation1 [shape = 'u32[144,128]{1,0:T(1,128)}', space=vmem, size = 0x12000, scoped, tag = 'internal scratch']
  %s0 = inlined_call_operand.vmem [shape: bf16[2,9,72], index: 0, kind: input, shape index: {}]
  %s1 = inlined_call_operand.vmem [shape: bf16[2,8,72], index: 1, kind: input, shape index: {}]
  %s2 = inlined_call_operand.hbm [shape: bf16[216,128], index: 2, kind: input, shape index: {}]
  %s3 = inlined_call_operand.vmem [shape: f32[1,128], index: 3, kind: input, shape index: {}]
  %s4 = inlined_call_operand.hbm [shape: f32[16,128], index: 4, kind: output, shape index: {}]
  %s5 = sld [smem:[#allocation0]]
  $region30: #{tpu_custom_call.1} parent=0
    _
  %s7 = ssub.s32 1, %s5
  %s8 = scalar_select 0, %s7, %s5
  $region1: #{tpu_custom_call.1} parent=0
    #allocation2 [shape = 'u8[55296]{0}', space=vmem, size = 0xd800, scoped, tag = 'input window, operand 2, single buffered']
    #allocation3 [shape = 's32[1]{0}', space=sflag, size = 0x4, scoped, tag = 'scoped memory for tpu_custom_call.1']
    #allocation4 [shape = 's32[1]{0}', space=sflag, size = 0x4, scoped, tag = 'scoped memory for tpu_custom_call.1']
    #allocation5 [shape = 'u8[8192]{0}', space=vmem, size = 0x2000, scoped, tag = 'output window, operand 0, single buffered']
    %9 = vsyncpa [#allocation3], 0
    %10 = vsyncpa [#allocation4], 0
    // Predicated region
    $region2: #{tpu_custom_call.1} parent=1 // pred_check
      _
    $region3: #{tpu_custom_call.1} parent=1 // pred_check_branch
      %12 = sbr.rel (0) target = $region5
    $region4: #{tpu_custom_call.1} parent=1 // pred_region
      _
    $region5: #{tpu_custom_call.1} parent=1 // pred_fallthru
      _
    // Predicated region
    $region6: #{tpu_custom_call.1} parent=1 // pred_check
      _
    $region7: #{tpu_custom_call.1} parent=1 // pred_check_branch
      %14 = sbr.rel (0) target = $region9
    $region8: #{tpu_custom_call.1} parent=1 // pred_region
      _
    $region9: #{tpu_custom_call.1} parent=1 // pred_fallthru
      _
    // Predicated region
    $region10: #{tpu_custom_call.1} parent=1 // pred_check
      _
    $region11: #{tpu_custom_call.1} parent=1 // pred_check_branch
      %16 = sbr.rel (0) target = $region13
    $region12: #{tpu_custom_call.1} parent=1 // pred_region
      %s18 = ssub.s32 1728, 1728
      %19 = vsyncadd [#allocation3], %s18
      %s20 = sshll.u32 [#allocation2], 4
      %s21 = int_to_ptr.vmem [resolvable:$true] %s20
      %26 = dma.hbm_to_vmem [thread:$0]  %s2, 1728, %s21, [#allocation3], 64, 64, 4
    $region13: #{tpu_custom_call.1} parent=1 // pred_fallthru
      _
    // Predicated region
    $region14: #{tpu_custom_call.1} parent=1 // pred_check
      _
    $region15: #{tpu_custom_call.1} parent=1 // pred_check_branch
      %28 = sbr.rel (0) target = $region17
    $region16: #{tpu_custom_call.1} parent=1 // pred_region
      _
    $region17: #{tpu_custom_call.1} parent=1 // pred_fallthru
      _
    // Predicated region
    $region18: #{tpu_custom_call.1} parent=1 // pred_check
      _
    $region19: #{tpu_custom_call.1} parent=1 // pred_check_branch
      %30 = sbr.rel (0) target = $region21
    $region20: #{tpu_custom_call.1} parent=1 // pred_region
      %31 = dma.done [#allocation3], 1728
    $region21: #{tpu_custom_call.1} parent=1 // pred_fallthru
      _
    %v33 = vld [vmem:[%s0] sm:$0xf]
    %v34 = vld [vmem:[%s0 + $0x4] sm:$0x1]
    %v35 = vld [vmem:[%s1] sm:$0xf]
    %v37 = vunpack.c.l.b16 %v35
    %v38 = vpack.c.b16 %v37, %v37
    %39 = vrot.lane.b32.xlu0 %v38, 72
    %v40 = vpop.permute.xlu0 %39
    %v43 = vunpack.c.l.b16 %v33
    %v44 = vunpack.c.l.b16 %v34
    %v45 = vpack.c.b16 %v44, %v43
    %v47 = vshrl.u32 %v45, 16
    %v49 = vshll.u32 %v45, 16
    %v51 = vrot.slane %v49, 1
    %v52 = vor.u32 %v47, %v51
    %53 = vrot.lane.b32.xlu0 %v52, 16
    %v54 = vpop.permute.xlu0 %53
    %vm55 = vcmask 588800
    %v58 = vsel %vm55, %v33, %v40
    %vm59 = vcmask 130048
    %v61 = vsel %vm59, %v40, %v54
    %s62 = scalar_lea.vmem %s0, 8
    %v63 = vld [vmem:[%s62] sm:$0xf]
    %v64 = vld [vmem:[%s62 + $0x4] sm:$0x1]
    %s65 = scalar_lea.vmem %s1, 4
    %v66 = vld [vmem:[%s65] sm:$0xf]
    %v68 = vunpack.c.l.b16 %v66
    %v69 = vpack.c.b16 %v68, %v68
    %70 = vrot.lane.b32.xlu0 %v69, 72
    %v71 = vpop.permute.xlu0 %70
    %v74 = vunpack.c.l.b16 %v63
    %v75 = vunpack.c.l.b16 %v64
    %v76 = vpack.c.b16 %v75, %v74
    %v78 = vshrl.u32 %v76, 16
    %v80 = vshll.u32 %v76, 16
    %v82 = vrot.slane %v80, 1
    %v83 = vor.u32 %v78, %v82
    %84 = vrot.lane.b32.xlu0 %v83, 16
    %v85 = vpop.permute.xlu0 %84
    %v88 = vsel %vm55, %v63, %v71
    %v90 = vsel %vm59, %v71, %v85
    %v93 = vrot.slane %v88, 4
    %v94 = vrot.slane %v90, 4
    %vm95 = vcmask 1043456
    %v97 = vsel %vm95, %v58, %v93
    %v100 = vsel %vm95, %v61, %v94
    %v101 = vld [vmem:[#allocation2] sm:$0xf]
    %v102 = vld [vmem:[#allocation2 + $0x4] sm:$0xf]
    %v103 = vld [vmem:[#allocation2 + $0x8] sm:$0xf]
    %v104 = vld [vmem:[#allocation2 + $0xc] sm:$0xf]
    %v105 = vld [vmem:[#allocation2 + $0x10] sm:$0xf]
    %v106 = vld [vmem:[#allocation2 + $0x14] sm:$0xf]
    %v107 = vld [vmem:[#allocation2 + $0x18] sm:$0xf]
    %v108 = vld [vmem:[#allocation2 + $0x1c] sm:$0xf]
    %v109 = vld [vmem:[#allocation2 + $0x20] sm:$0xf]
    %v110 = vld [vmem:[#allocation2 + $0x24] sm:$0xf]
    %v111 = vld [vmem:[#allocation2 + $0x28] sm:$0xf]
    %v112 = vld [vmem:[#allocation2 + $0x2c] sm:$0xf]
    %v113 = vld [vmem:[#allocation2 + $0x30] sm:$0xf]
    %v114 = vld [vmem:[#allocation2 + $0x34] sm:$0xf]
    %v115 = vld [vmem:[#allocation2 + $0x38] sm:$0xf]
    %v116 = vld [vmem:[#allocation2 + $0x3c] sm:$0xf]
    %v117 = vld [vmem:[#allocation2 + $0x40] sm:$0xf]
    %v118 = vld [vmem:[#allocation2 + $0x44] sm:$0xf]
    %v119 = vld [vmem:[#allocation2 + $0x48] sm:$0xf]
    %v120 = vld [vmem:[#allocation2 + $0x4c] sm:$0xf]
    %v121 = vld [vmem:[#allocation2 + $0x50] sm:$0xf]
    %v122 = vld [vmem:[#allocation2 + $0x54] sm:$0xf]
    %v123 = vld [vmem:[#allocation2 + $0x58] sm:$0xf]
    %v124 = vld [vmem:[#allocation2 + $0x5c] sm:$0xf]
    %v125 = vld [vmem:[#allocation2 + $0x60] sm:$0xf]
    %v126 = vld [vmem:[#allocation2 + $0x64] sm:$0xf]
    %v127 = vld [vmem:[#allocation2 + $0x68] sm:$0xf]
    %v128 = vld [vmem:[%s3] sm:$0x1]
    %v130 = vlaneseq
    %v131 = vshrl.u32 %v130, 7
    %v132 = vsub.s32 0, %v131
    %v133 = vrot.slane %v128, %v132
    %v162 = vunpack.c.l.b16 %v101
    %v163 = vunpack.c.l.b16 %v102
    %v164 = vunpack.c.l.b16 %v103
    %v165 = vunpack.c.l.b16 %v104
    %v166 = vunpack.c.l.b16 %v105
    %v167 = vunpack.c.l.b16 %v106
    %v168 = vunpack.c.l.b16 %v107
    %v169 = vunpack.c.l.b16 %v108
    %v170 = vunpack.c.l.b16 %v109
    %v171 = vunpack.c.l.b16 %v110
    %v172 = vunpack.c.l.b16 %v111
    %v173 = vunpack.c.l.b16 %v112
    %v174 = vunpack.c.l.b16 %v113
    %v175 = vunpack.c.l.b16 %v114
    %v176 = vunpack.c.l.b16 %v115
    %v177 = vunpack.c.l.b16 %v116
    %v178 = vunpack.c.l.b16 %v117
    %v179 = vunpack.c.l.b16 %v118
    %v180 = vunpack.c.l.b16 %v119
    %v181 = vunpack.c.l.b16 %v120
    %v182 = vunpack.c.l.b16 %v121
    %v183 = vunpack.c.l.b16 %v122
    %v184 = vunpack.c.l.b16 %v123
    %v185 = vunpack.c.l.b16 %v124
    %v186 = vunpack.c.l.b16 %v125
    %v187 = vunpack.c.l.b16 %v126
    %v188 = vunpack.c.l.b16 %v127
    %v189 = vpack.c.b16 %v163, %v162
    %v190 = vpack.c.b16 %v165, %v164
    %v191 = vpack.c.b16 %v167, %v166
    %v192 = vpack.c.b16 %v169, %v168
    %v193 = vpack.c.b16 %v171, %v170
    %v194 = vpack.c.b16 %v173, %v172
    %v195 = vpack.c.b16 %v175, %v174
    %v196 = vpack.c.b16 %v177, %v176
    %v197 = vpack.c.b16 %v179, %v178
    %v198 = vpack.c.b16 %v181, %v180
    %v199 = vpack.c.b16 %v183, %v182
    %v200 = vpack.c.b16 %v185, %v184
    %v201 = vpack.c.b16 %v187, %v186
    %v202 = vpack.c.b16 %v188, %v188
    %vm216 = vcmask 719872
    %v217 = vsel %vm216, %v100, 0
    %v220 = vsel %vm95, %v202, 0
    %222 = vmatprep.subr.bf16.mxu0 0
    %223 = vmatpush1.bf16.msra.mxu0 %v189
    %224 = vmatprep.subr.bf16.mxu0 0
    %225 = vmatpush1.bf16.msra.mxu0 %v190
    %226 = vmatprep.subr.bf16.mxu0 0
    %227 = vmatpush1.bf16.msra.mxu0 %v191
    %228 = vmatprep.subr.bf16.mxu0 0
    %229 = vmatpush1.bf16.msra.mxu0 %v192
    %230 = vmatprep.subr.bf16.mxu0 0
    %231 = vmatpush1.bf16.msra.mxu0 %v193
    %232 = vmatprep.subr.bf16.mxu0 0
    %233 = vmatpush1.bf16.msra.mxu0 %v194
    %234 = vmatprep.subr.bf16.mxu0 0
    %235 = vmatpush1.bf16.msra.mxu0 %v195
    %236 = vmatprep.subr.bf16.mxu0 0
    %237 = vmatpush1.bf16.msra.mxu0 %v196
    %238 = vmatprep.subr.bf16.mxu0 0
    %239 = vmatpush1.bf16.msra.mxu0 %v197
    %240 = vmatprep.subr.bf16.mxu0 0
    %241 = vmatpush1.bf16.msra.mxu0 %v198
    %242 = vmatprep.subr.bf16.mxu0 0
    %243 = vmatpush1.bf16.msra.mxu0 %v199
    %244 = vmatprep.subr.bf16.mxu0 0
    %245 = vmatpush1.bf16.msra.mxu0 %v200
    %246 = vmatprep.subr.bf16.mxu0 0
    %247 = vmatpush1.bf16.msra.mxu0 %v201
    %248 = vmatprep.subr.bf16.mxu0 0
    %249 = vmatpush1.bf16.msra.mxu0 %v220
    %250 = vmatprep.subr.bf16.mxu0 0
    %251 = vmatpush1.bf16.msra.mxu0 0
    %252 = vmatprep.subr.bf16.mxu0 0
    %253 = vmatpush1.bf16.msra.mxu0 0
    %254 = vmatprep.mubr.bf16.mxu0 %v217
    %255 = vmatmul.mubr.bf16.gmra.mrb[0].mxu0 %v97
    %v256 = vpop.f32.mrb[0].mxu0
    %v257 = vadd.f32 %v133, %v256
    %v258 = vpop.f32.mrb[0].mxu0
    %v259 = vpop.f32.mrb[0].mxu0
    %v260 = vadd.f32 %v133, %v259
    %v261 = vpop.f32.mrb[0].mxu0
    %262 = vdwg.mxu0
    %v263 = vmul.f32 %v257, 0.2
    %v264 = vmul.f32 %v260, 0.2
    %v265 = vmax.f32 %v257, %v263
    %v266 = vmax.f32 %v260, %v264
    %267 = vst [vmem:[#allocation5] sm:$0xff] %v265
    %268 = vst [vmem:[#allocation5 + $0x8] sm:$0xff] %v266
    // Predicated region
    $region22: #{tpu_custom_call.1} parent=1 // pred_check
      _
    $region23: #{tpu_custom_call.1} parent=1 // pred_check_branch
      %270 = sbr.rel (0) target = $region25
    $region24: #{tpu_custom_call.1} parent=1 // pred_region
      %s272 = ssub.s32 256, 256
      %273 = vsyncadd [#allocation4], %s272
      %s274 = sshll.u32 [#allocation5], 4
      %s275 = int_to_ptr.vmem [resolvable:$true] %s274
      %280 = dma.vmem_to_hbm [thread:$0]  %s275, 256, %s4, [#allocation4], 128, 128, 8
    $region25: #{tpu_custom_call.1} parent=1 // pred_fallthru
      _
    // Predicated region
    $region26: #{tpu_custom_call.1} parent=1 // pred_check
      _
    $region27: #{tpu_custom_call.1} parent=1 // pred_check_branch
      %282 = sbr.rel (0) target = $region29
    $region28: #{tpu_custom_call.1} parent=1 // pred_region
      %283 = dma.done [#allocation4], 256
    $region29: #{tpu_custom_call.1} parent=1 // pred_fallthru
      _
    %284 = vsyncpa [#allocation3], 1
    %285 = vsyncpa [#allocation4], 1

</llo_original>
